<compile_context>
chip_gen: v7x
topology: tpu7x:2x2x1
jax: 0.10.0
libtpu: 0.0.40
codegen_flags: <defaults>
</compile_context>

<pallas_src>
import functools

import jax
import jax.numpy as jnp
from jax.experimental import pallas as pl
from jax.experimental.pallas import tpu as pltpu

LN_EPS = 1e-5
_LANE = 128
_SUBLANE = 8
_CHUNK_ROWS = 128   # in-kernel row sub-chunk for MXU/VPU interleave


def _round_up(x, m):
    return (x + m - 1) // m * m


def _gelu_tanh(x):
    # tanh-approximate GELU: the transcendental runs on the EUP slot instead
    # of an erf polynomial on the VALU.  Deviation from torch's exact-erf
    # GELU is ~3e-4 abs (covered by the test tolerance).
    c = 0.7978845608028654  # sqrt(2/pi)
    return 0.5 * x * (1.0 + jnp.tanh(c * (x + 0.044715 * x * x * x)))


def _gelu_exact(x):
    # torch nn.GELU default (exact erf) -- used by the pure-JAX reference.
    return 0.5 * x * (1.0 + jax.lax.erf(x * 0.7071067811865476))


def _layernorm_1pass(x, gamma, beta, true_n):
    # Single traversal: sum + sum-of-squares; var = E[x^2] - mu^2 (clamped to
    # >= 0 to guard the cancellation corner case).  Dividing by the TRUE
    # feature width makes zero-padded lanes exact (they contribute 0 to both
    # sums, and padded gamma/beta/weight columns are zero downstream).
    inv_n = 1.0 / true_n
    s = jnp.sum(x, axis=-1, keepdims=True)
    s2 = jnp.sum(x * x, axis=-1, keepdims=True)
    mu = s * inv_n
    var = jnp.maximum(s2 * inv_n - mu * mu, 0.0)
    return (x - mu) * jax.lax.rsqrt(var + LN_EPS) * gamma + beta


def token_mixer_kernel(x_ref, g1_ref, b1_ref, w1t_ref, g2_ref, b2_ref,
                       w2t_ref, bias2_ref, o_ref, *,
                       true_h, true_i, chunk_rows, n_chunks):
    # Hoist grid-invariant loads out of the chunk loop (JAX does not CSE the
    # broadcasts, so per-chunk re-loads would be paid every iteration).
    g1, b1 = g1_ref[...], b1_ref[...]
    g2, b2 = g2_ref[...], b2_ref[...]
    w1t, w2t = w1t_ref[...], w2t_ref[...]
    bias2 = bias2_ref[...]

    def chunk_body(c, carry):
        r0 = pl.multiple_of(c * chunk_rows, chunk_rows)
        x = x_ref[pl.ds(r0, chunk_rows), :].astype(jnp.float32)

        # --- LN1 -> (dropout: identity) -> GELU -> linear1 (no bias) ---
        h = _gelu_tanh(_layernorm_1pass(x, g1, b1, true_h))
        y = jnp.dot(h.astype(jnp.bfloat16), w1t,
                    preferred_element_type=jnp.float32)           # (chunk, Ip)

        # --- LN2 -> (dropout: identity) -> GELU -> linear2 (+ bias) ---
        h2 = _gelu_tanh(_layernorm_1pass(y, g2, b2, true_i))
        out = jnp.dot(h2.astype(jnp.bfloat16), w2t,
                      preferred_element_type=jnp.float32) + bias2  # (chunk, Hp)

        o_ref[pl.ds(r0, chunk_rows), :] = out.astype(o_ref.dtype)
        return carry

    # Unrolled so the LLO scheduler can overlap chunk i+1's VPU/EUP work with
    # chunk i's MXU matmuls.
    jax.lax.fori_loop(0, n_chunks, chunk_body, 0, unroll=True)


def _vmem_capacity_bytes():
    try:
        return int(pltpu.get_tpu_info().vmem_capacity_bytes)
    except Exception:
        return 64 * 2 ** 20          # conservative default: v7x physical VMEM


@functools.partial(jax.jit, static_argnames=("internal_dim", "tm"))
def mhba_token_mixer(x, params, *, internal_dim, tm=512):
    """x: (..., hidden). params: output of prepare_params(). Returns bf16."""
    orig_shape = x.shape
    H = orig_shape[-1]
    x2d = x.reshape(-1, H)
    rows = x2d.shape[0]

    Hp, Ip = params["w1t"].shape

    # ---------------- generation-aware VMEM budgeting ----------------
    vmem_cap = _vmem_capacity_bytes()
    budget = int(0.80 * vmem_cap)                 # headroom for compiler temps
    weight_bytes = 2 * (Hp * Ip) * 2              # w1t + w2t, bf16, single-buf
    const_bytes = 8 * (Hp + Ip) * 4               # LN params + bias (padded)
    temp_bytes = 3 * _CHUNK_ROWS * (Hp + Ip) * 4  # live f32 temps (unrolled)
    io_bytes_per_row = 8 * Hp                     # bf16 x + out, double-buffered

    avail = budget - weight_bytes - const_bytes - temp_bytes
    if avail < io_bytes_per_row * _SUBLANE:
        # TODO(synk): weight-K streaming fallback for non-resident weights.
        raise ValueError(
            f"token-mixer bf16 weights ({weight_bytes / 2**20:.1f} MiB) do not "
            f"fit resident in VMEM (capacity {vmem_cap / 2**20:.0f} MiB); "
            "the weight-streaming fallback is not implemented.")

    tm_cap = max(_SUBLANE, avail // io_bytes_per_row)
    tm_req = min(tm, tm_cap, _round_up(rows, _SUBLANE))
    if tm_req >= _CHUNK_ROWS:
        chunk_rows = _CHUNK_ROWS
        tm_eff = (tm_req // _CHUNK_ROWS) * _CHUNK_ROWS
    else:
        tm_eff = max(_SUBLANE, (tm_req // _SUBLANE) * _SUBLANE)
        chunk_rows = tm_eff
    n_chunks = tm_eff // chunk_rows

    # No row padding: Pallas masks the OOB part of the last block's writeback;
    # garbage rows read by that block only affect themselves (row-local ops).
    grid = (pl.cdiv(rows, tm_eff),)

    # ---------------- bf16 row streaming, lane padding only if needed -------
    if H != Hp:
        x_in = (jnp.zeros((rows, Hp), jnp.bfloat16)
                .at[:, :H].set(x2d.astype(jnp.bfloat16)))
    elif x2d.dtype != jnp.bfloat16:
        x_in = x2d.astype(jnp.bfloat16)
    else:
        x_in = x2d

    kernel = functools.partial(token_mixer_kernel,
                               true_h=H, true_i=internal_dim,
                               chunk_rows=chunk_rows, n_chunks=n_chunks)

    row_spec = pl.BlockSpec((tm_eff, Hp), lambda i: (i, 0))

    def const_spec(shape):
        # Grid-invariant operand: one VMEM buffer is enough (no re-fetch).
        return pl.BlockSpec(shape, lambda i: (0, 0),
                            pipeline_mode=pl.Buffered(1))

    vmem_limit = int(min(0.90 * vmem_cap, 128 * 2 ** 20))

    out = pl.pallas_call(
        kernel,
        out_shape=jax.ShapeDtypeStruct((rows, Hp), jnp.bfloat16),
        grid_spec=pltpu.PrefetchScalarGridSpec(
            num_scalar_prefetch=0,
            grid=grid,
            in_specs=[
                row_spec,                  # x row tile (bf16)
                const_spec((1, Hp)),       # ln1 gamma
                const_spec((1, Hp)),       # ln1 beta
                const_spec((Hp, Ip)),      # linear1 weight^T (bf16)
                const_spec((1, Ip)),       # ln2 gamma
                const_spec((1, Ip)),       # ln2 beta
                const_spec((Ip, Hp)),      # linear2 weight^T (bf16)
                const_spec((1, Hp)),       # linear2 bias
            ],
            out_specs=row_spec,
        ),
        compiler_params=pltpu.CompilerParams(
            dimension_semantics=("parallel",),
            vmem_limit_bytes=vmem_limit),
    )(x_in, params["g1"], params["b1"], params["w1t"],
      params["g2"], params["b2"], params["w2t"], params["bias2"])

    out2d = out if Hp == H else out[:, :H]
    return out2d.reshape(orig_shape)


def init_torch_params(key, hidden_dim, internal_dim):
    """Parameters in the PyTorch module's native layout (f32, unpadded)."""
    k1, k2, k3 = jax.random.split(key, 3)
    s1 = 1.0 / jnp.sqrt(hidden_dim)
    s2 = 1.0 / jnp.sqrt(internal_dim)
    return {
        "ln1_g": jnp.ones((hidden_dim,), jnp.float32),
        "ln1_b": jnp.zeros((hidden_dim,), jnp.float32),
        "w1": jax.random.uniform(k1, (internal_dim, hidden_dim), jnp.float32,
                                 -s1, s1),                     # linear1.weight
        "ln2_g": jnp.ones((internal_dim,), jnp.float32),
        "ln2_b": jnp.zeros((internal_dim,), jnp.float32),
        "w2": jax.random.uniform(k2, (hidden_dim, internal_dim), jnp.float32,
                                 -s2, s2),                     # linear2.weight
        "b2": jax.random.uniform(k3, (hidden_dim,), jnp.float32, -s2, s2),
    }


def prepare_params(tp, hidden_dim, internal_dim):
    """Pad feature dims to multiples of 128 (padded columns = 0 so zero
    padding is exact), pre-transpose weights for row-major x @ W^T, and cast
    matmul operands to bf16 (MXU-native)."""
    Hp = _round_up(hidden_dim, _LANE)
    Ip = _round_up(internal_dim, _LANE)

    def pad_vec(v, n):
        return jnp.zeros((1, n), jnp.float32).at[0, :v.shape[0]].set(v)

    w1t = (jnp.zeros((Hp, Ip), jnp.float32)
           .at[:hidden_dim, :internal_dim].set(tp["w1"].T))
    w2t = (jnp.zeros((Ip, Hp), jnp.float32)
           .at[:internal_dim, :hidden_dim].set(tp["w2"].T))
    return {
        "g1": pad_vec(tp["ln1_g"], Hp),
        "b1": pad_vec(tp["ln1_b"], Hp),
        "w1t": w1t.astype(jnp.bfloat16),
        "g2": pad_vec(tp["ln2_g"], Ip),
        "b2": pad_vec(tp["ln2_b"], Ip),
        "w2t": w2t.astype(jnp.bfloat16),
        "bias2": pad_vec(tp["b2"], Hp),
    }


def reference(x, tp):
    """Pure-JAX f32 eval-mode forward matching the PyTorch module."""
    def ln(v, g, b):
        mu = jnp.mean(v, axis=-1, keepdims=True)
        var = jnp.mean((v - mu) ** 2, axis=-1, keepdims=True)
        return (v - mu) / jnp.sqrt(var + LN_EPS) * g + b

    h = _gelu_exact(ln(x, tp["ln1_g"], tp["ln1_b"]))
    y = h @ tp["w1"].T
    h2 = _gelu_exact(ln(y, tp["ln2_g"], tp["ln2_b"]))
    return h2 @ tp["w2"].T + tp["b2"]


if __name__ == "__main__":
    batch, seq, hidden, internal = 2, 8, 32, 64
    key = jax.random.PRNGKey(0)
    kx, kp = jax.random.split(key)

    x = jax.random.normal(kx, (batch, seq, hidden), jnp.float32)
    torch_params = init_torch_params(kp, hidden, internal)
    params = prepare_params(torch_params, hidden, internal)

    out = mhba_token_mixer(x, params, internal_dim=internal)
    jax.block_until_ready(out)

    ref = reference(x, torch_params)
    out_f32 = out.astype(jnp.float32)
    max_err = float(jnp.max(jnp.abs(out_f32 - ref)))
    # bf16-streamed activations + bf16 MXU operands (f32 accumulation) + the
    # tanh-approximate GELU: allow modest deviation vs the exact f32/erf ref.
    assert jnp.allclose(out_f32, ref, atol=3e-2, rtol=3e-2), (
        f"mismatch vs reference: max abs err {max_err:.3e}")

    print("KERNEL_OK")
</pallas_src>

<mosaic_0001>
module attributes {stable_mosaic.version = 11 : i64} {
  func.func @token_mixer_kernel(%arg0: i32, %arg1: memref<16x128xbf16, #tpu.memory_space<vmem>>, %arg2: memref<1x128xf32, #tpu.memory_space<vmem>>, %arg3: memref<1x128xf32, #tpu.memory_space<vmem>>, %arg4: memref<128x128xbf16, #tpu.memory_space<vmem>>, %arg5: memref<1x128xf32, #tpu.memory_space<vmem>>, %arg6: memref<1x128xf32, #tpu.memory_space<vmem>>, %arg7: memref<128x128xbf16, #tpu.memory_space<vmem>>, %arg8: memref<1x128xf32, #tpu.memory_space<vmem>>, %arg9: memref<16x128xbf16, #tpu.memory_space<vmem>>) attributes {dimension_semantics = [#tpu.dimension_semantics<parallel>], iteration_bounds = array<i64: 1>, scalar_prefetch = 0 : i64, scratch_operands = 0 : i64, tpu.core_type = #tpu.core_type<tc>, window_params = [{transform_indices = @transform_0, window_bounds = array<i64: 16, 128>}, {pipeline_mode = #tpu.pipeline_mode<synchronous>, transform_indices = @transform_1, window_bounds = array<i64: 1, 128>}, {pipeline_mode = #tpu.pipeline_mode<synchronous>, transform_indices = @transform_2, window_bounds = array<i64: 1, 128>}, {pipeline_mode = #tpu.pipeline_mode<synchronous>, transform_indices = @transform_3, window_bounds = array<i64: 128, 128>}, {pipeline_mode = #tpu.pipeline_mode<synchronous>, transform_indices = @transform_4, window_bounds = array<i64: 1, 128>}, {pipeline_mode = #tpu.pipeline_mode<synchronous>, transform_indices = @transform_5, window_bounds = array<i64: 1, 128>}, {pipeline_mode = #tpu.pipeline_mode<synchronous>, transform_indices = @transform_6, window_bounds = array<i64: 128, 128>}, {pipeline_mode = #tpu.pipeline_mode<synchronous>, transform_indices = @transform_7, window_bounds = array<i64: 1, 128>}, {transform_indices = @transform_8, window_bounds = array<i64: 16, 128>}]} {
    %c0 = arith.constant 0 : index
    %c0_0 = arith.constant 0 : index
    %0 = vector.load %arg2[%c0, %c0_0] : memref<1x128xf32, #tpu.memory_space<vmem>>, vector<1x128xf32>
    %c0_1 = arith.constant 0 : index
    %c0_2 = arith.constant 0 : index
    %1 = vector.load %arg3[%c0_1, %c0_2] : memref<1x128xf32, #tpu.memory_space<vmem>>, vector<1x128xf32>
    %c0_3 = arith.constant 0 : index
    %c0_4 = arith.constant 0 : index
    %2 = vector.load %arg5[%c0_3, %c0_4] : memref<1x128xf32, #tpu.memory_space<vmem>>, vector<1x128xf32>
    %c0_5 = arith.constant 0 : index
    %c0_6 = arith.constant 0 : index
    %3 = vector.load %arg6[%c0_5, %c0_6] : memref<1x128xf32, #tpu.memory_space<vmem>>, vector<1x128xf32>
    %c0_7 = arith.constant 0 : index
    %c0_8 = arith.constant 0 : index
    %4 = vector.load %arg4[%c0_7, %c0_8] : memref<128x128xbf16, #tpu.memory_space<vmem>>, vector<128x128xbf16>
    %c0_9 = arith.constant 0 : index
    %c0_10 = arith.constant 0 : index
    %5 = vector.load %arg7[%c0_9, %c0_10] : memref<128x128xbf16, #tpu.memory_space<vmem>>, vector<128x128xbf16>
    %c0_11 = arith.constant 0 : index
    %c0_12 = arith.constant 0 : index
    %6 = vector.load %arg8[%c0_11, %c0_12] : memref<1x128xf32, #tpu.memory_space<vmem>>, vector<1x128xf32>
    %c0_i32 = arith.constant 0 : i32
    %c16_i32 = arith.constant 16 : i32
    %7 = arith.muli %c0_i32, %c16_i32 : i32
    %8 = tpu.assume_multiple %7, 16 : i32
    %9 = arith.index_cast %8 : i32 to index
    %c0_13 = arith.constant 0 : index
    %10 = vector.load %arg1[%9, %c0_13] : memref<16x128xbf16, #tpu.memory_space<vmem>>, vector<16x128xbf16>
    %11 = arith.extf %10 : vector<16x128xbf16> to vector<16x128xf32>
    %cst = arith.constant dense<0.000000e+00> : vector<16xf32>
    %12 = vector.multi_reduction <add>, %11, %cst [1] : vector<16x128xf32> to vector<16xf32>
    %13 = vector.shape_cast %12 : vector<16xf32> to vector<16x1xf32>
    %14 = arith.mulf %11, %11 : vector<16x128xf32>
    %cst_14 = arith.constant dense<0.000000e+00> : vector<16xf32>
    %15 = vector.multi_reduction <add>, %14, %cst_14 [1] : vector<16x128xf32> to vector<16xf32>
    %16 = vector.shape_cast %15 : vector<16xf32> to vector<16x1xf32>
    %cst_15 = arith.constant 3.125000e-02 : f32
    %17 = vector.broadcast %cst_15 : f32 to vector<16x1xf32>
    %18 = arith.mulf %13, %17 : vector<16x1xf32>
    %cst_16 = arith.constant 3.125000e-02 : f32
    %19 = vector.broadcast %cst_16 : f32 to vector<16x1xf32>
    %20 = arith.mulf %16, %19 : vector<16x1xf32>
    %21 = arith.mulf %18, %18 : vector<16x1xf32>
    %22 = arith.subf %20, %21 : vector<16x1xf32>
    %cst_17 = arith.constant 0.000000e+00 : f32
    %23 = vector.broadcast %cst_17 : f32 to vector<16x1xf32>
    %24 = arith.maximumf %22, %23 : vector<16x1xf32>
    %25 = vector.broadcast %18 : vector<16x1xf32> to vector<16x128xf32>
    %26 = arith.subf %11, %25 : vector<16x128xf32>
    %cst_18 = arith.constant 9.99999974E-6 : f32
    %27 = vector.broadcast %cst_18 : f32 to vector<16x1xf32>
    %28 = arith.addf %24, %27 : vector<16x1xf32>
    %29 = math.rsqrt %28 : vector<16x1xf32>
    %30 = vector.broadcast %29 : vector<16x1xf32> to vector<16x128xf32>
    %31 = arith.mulf %26, %30 : vector<16x128xf32>
    %32 = vector.broadcast %0 : vector<1x128xf32> to vector<16x128xf32>
    %33 = arith.mulf %31, %32 : vector<16x128xf32>
    %34 = vector.broadcast %1 : vector<1x128xf32> to vector<16x128xf32>
    %35 = arith.addf %33, %34 : vector<16x128xf32>
    %cst_19 = arith.constant 5.000000e-01 : f32
    %36 = vector.broadcast %cst_19 : f32 to vector<16x128xf32>
    %37 = arith.mulf %36, %35 : vector<16x128xf32>
    %cst_20 = arith.constant 4.471500e-02 : f32
    %38 = vector.broadcast %cst_20 : f32 to vector<16x128xf32>
    %39 = arith.mulf %38, %35 : vector<16x128xf32>
    %40 = arith.mulf %39, %35 : vector<16x128xf32>
    %41 = arith.mulf %40, %35 : vector<16x128xf32>
    %42 = arith.addf %35, %41 : vector<16x128xf32>
    %cst_21 = arith.constant 0.797884583 : f32
    %43 = vector.broadcast %cst_21 : f32 to vector<16x128xf32>
    %44 = arith.mulf %43, %42 : vector<16x128xf32>
    %45 = math.tanh %44 : vector<16x128xf32>
    %cst_22 = arith.constant 1.000000e+00 : f32
    %46 = vector.broadcast %cst_22 : f32 to vector<16x128xf32>
    %47 = arith.addf %46, %45 : vector<16x128xf32>
    %48 = arith.mulf %37, %47 : vector<16x128xf32>
    %49 = arith.truncf %48 : vector<16x128xf32> to vector<16x128xbf16>
    %cst_23 = arith.constant dense<0.000000e+00> : vector<16x128xf32>
    %50 = tpu.matmul %49, %4, %cst_23 {dimension_numbers = #tpu.dot_dimension_numbers<[1], [0], [0], [1], [0, 0, 1, 1], [], []>} : vector<16x128xbf16>, vector<128x128xbf16>, vector<16x128xf32> -> vector<16x128xf32>
    %cst_24 = arith.constant dense<0.000000e+00> : vector<16xf32>
    %51 = vector.multi_reduction <add>, %50, %cst_24 [1] : vector<16x128xf32> to vector<16xf32>
    %52 = vector.shape_cast %51 : vector<16xf32> to vector<16x1xf32>
    %53 = arith.mulf %50, %50 : vector<16x128xf32>
    %cst_25 = arith.constant dense<0.000000e+00> : vector<16xf32>
    %54 = vector.multi_reduction <add>, %53, %cst_25 [1] : vector<16x128xf32> to vector<16xf32>
    %55 = vector.shape_cast %54 : vector<16xf32> to vector<16x1xf32>
    %cst_26 = arith.constant 1.562500e-02 : f32
    %56 = vector.broadcast %cst_26 : f32 to vector<16x1xf32>
    %57 = arith.mulf %52, %56 : vector<16x1xf32>
    %cst_27 = arith.constant 1.562500e-02 : f32
    %58 = vector.broadcast %cst_27 : f32 to vector<16x1xf32>
    %59 = arith.mulf %55, %58 : vector<16x1xf32>
    %60 = arith.mulf %57, %57 : vector<16x1xf32>
    %61 = arith.subf %59, %60 : vector<16x1xf32>
    %cst_28 = arith.constant 0.000000e+00 : f32
    %62 = vector.broadcast %cst_28 : f32 to vector<16x1xf32>
    %63 = arith.maximumf %61, %62 : vector<16x1xf32>
    %64 = vector.broadcast %57 : vector<16x1xf32> to vector<16x128xf32>
    %65 = arith.subf %50, %64 : vector<16x128xf32>
    %cst_29 = arith.constant 9.99999974E-6 : f32
    %66 = vector.broadcast %cst_29 : f32 to vector<16x1xf32>
    %67 = arith.addf %63, %66 : vector<16x1xf32>
    %68 = math.rsqrt %67 : vector<16x1xf32>
    %69 = vector.broadcast %68 : vector<16x1xf32> to vector<16x128xf32>
    %70 = arith.mulf %65, %69 : vector<16x128xf32>
    %71 = vector.broadcast %2 : vector<1x128xf32> to vector<16x128xf32>
    %72 = arith.mulf %70, %71 : vector<16x128xf32>
    %73 = vector.broadcast %3 : vector<1x128xf32> to vector<16x128xf32>
    %74 = arith.addf %72, %73 : vector<16x128xf32>
    %cst_30 = arith.constant 5.000000e-01 : f32
    %75 = vector.broadcast %cst_30 : f32 to vector<16x128xf32>
    %76 = arith.mulf %75, %74 : vector<16x128xf32>
    %cst_31 = arith.constant 4.471500e-02 : f32
    %77 = vector.broadcast %cst_31 : f32 to vector<16x128xf32>
    %78 = arith.mulf %77, %74 : vector<16x128xf32>
    %79 = arith.mulf %78, %74 : vector<16x128xf32>
    %80 = arith.mulf %79, %74 : vector<16x128xf32>
    %81 = arith.addf %74, %80 : vector<16x128xf32>
    %cst_32 = arith.constant 0.797884583 : f32
    %82 = vector.broadcast %cst_32 : f32 to vector<16x128xf32>
    %83 = arith.mulf %82, %81 : vector<16x128xf32>
    %84 = math.tanh %83 : vector<16x128xf32>
    %cst_33 = arith.constant 1.000000e+00 : f32
    %85 = vector.broadcast %cst_33 : f32 to vector<16x128xf32>
    %86 = arith.addf %85, %84 : vector<16x128xf32>
    %87 = arith.mulf %76, %86 : vector<16x128xf32>
    %88 = arith.truncf %87 : vector<16x128xf32> to vector<16x128xbf16>
    %cst_34 = arith.constant dense<0.000000e+00> : vector<16x128xf32>
    %89 = tpu.matmul %88, %5, %cst_34 {dimension_numbers = #tpu.dot_dimension_numbers<[1], [0], [0], [1], [0, 0, 1, 1], [], []>} : vector<16x128xbf16>, vector<128x128xbf16>, vector<16x128xf32> -> vector<16x128xf32>
    %90 = vector.broadcast %6 : vector<1x128xf32> to vector<16x128xf32>
    %91 = arith.addf %89, %90 : vector<16x128xf32>
    %92 = arith.truncf %91 : vector<16x128xf32> to vector<16x128xbf16>
    %93 = arith.index_cast %8 : i32 to index
    %c0_35 = arith.constant 0 : index
    %94 = vector.load %arg9[%93, %c0_35] : memref<16x128xbf16, #tpu.memory_space<vmem>>, vector<16x128xbf16>
    tpu.vector_store %arg9[%93, %c0_35], %92 {strides = array<i32>} : memref<16x128xbf16, #tpu.memory_space<vmem>>, vector<16x128xbf16>,
    %c1_i32 = arith.constant 1 : i32
    return
  }
  func.func @transform_0(%arg0: i32) -> (i32, i32) {
    %c0_i32 = arith.constant 0 : i32
    %c0_i32_0 = arith.constant 0 : i32
    return %arg0, %c0_i32 : i32, i32
  }
  func.func @transform_1(%arg0: i32) -> (i32, i32) {
    %c0_i32 = arith.constant 0 : i32
    %c0_i32_0 = arith.constant 0 : i32
    %c0_i32_1 = arith.constant 0 : i32
    return %c0_i32, %c0_i32_0 : i32, i32
  }
  func.func @transform_2(%arg0: i32) -> (i32, i32) {
    %c0_i32 = arith.constant 0 : i32
    %c0_i32_0 = arith.constant 0 : i32
    %c0_i32_1 = arith.constant 0 : i32
    return %c0_i32, %c0_i32_0 : i32, i32
  }
  func.func @transform_3(%arg0: i32) -> (i32, i32) {
    %c0_i32 = arith.constant 0 : i32
    %c0_i32_0 = arith.constant 0 : i32
    %c0_i32_1 = arith.constant 0 : i32
    return %c0_i32, %c0_i32_0 : i32, i32
  }
  func.func @transform_4(%arg0: i32) -> (i32, i32) {
    %c0_i32 = arith.constant 0 : i32
    %c0_i32_0 = arith.constant 0 : i32
    %c0_i32_1 = arith.constant 0 : i32
    return %c0_i32, %c0_i32_0 : i32, i32
  }
  func.func @transform_5(%arg0: i32) -> (i32, i32) {
    %c0_i32 = arith.constant 0 : i32
    %c0_i32_0 = arith.constant 0 : i32
    %c0_i32_1 = arith.constant 0 : i32
    return %c0_i32, %c0_i32_0 : i32, i32
  }
  func.func @transform_6(%arg0: i32) -> (i32, i32) {
    %c0_i32 = arith.constant 0 : i32
    %c0_i32_0 = arith.constant 0 : i32
    %c0_i32_1 = arith.constant 0 : i32
    return %c0_i32, %c0_i32_0 : i32, i32
  }
  func.func @transform_7(%arg0: i32) -> (i32, i32) {
    %c0_i32 = arith.constant 0 : i32
    %c0_i32_0 = arith.constant 0 : i32
    %c0_i32_1 = arith.constant 0 : i32
    return %c0_i32, %c0_i32_0 : i32, i32
  }
  func.func @transform_8(%arg0: i32) -> (i32, i32) {
    %c0_i32 = arith.constant 0 : i32
    %c0_i32_0 = arith.constant 0 : i32
    return %arg0, %c0_i32 : i32, i32
  }
}

</mosaic_0001>

<llo_original>
// kernel: mhba_token_mixer.1
$region0: #{mhba_token_mixer.1}
  #allocation0 [shape = 'u32[]', space=smem, size = 0x4, offset = 0x4, fixed_abs, tag = 'smem constant byte address 0x4 - core index']
  #allocation1 [shape = 'u32[144,128]{1,0:T(1,128)}', space=vmem, size = 0x12000, scoped, tag = 'internal scratch']
  %s0 = inlined_call_operand.vmem [shape: bf16[16,128], index: 0, kind: input, shape index: {}]
  %s1 = inlined_call_operand.vmem [shape: f32[1,128], index: 1, kind: input, shape index: {}]
  %s2 = inlined_call_operand.vmem [shape: f32[1,128], index: 2, kind: input, shape index: {}]
  %s3 = inlined_call_operand.vmem [shape: bf16[128,128], index: 3, kind: input, shape index: {}]
  %s4 = inlined_call_operand.vmem [shape: f32[1,128], index: 4, kind: input, shape index: {}]
  %s5 = inlined_call_operand.vmem [shape: f32[1,128], index: 5, kind: input, shape index: {}]
  %s6 = inlined_call_operand.hbm [shape: bf16[128,128], index: 6, kind: input, shape index: {}]
  %s7 = inlined_call_operand.hbm [shape: f32[1,128], index: 7, kind: input, shape index: {}]
  %s8 = inlined_call_operand.vmem [shape: bf16[16,128], index: 8, kind: output, shape index: {}]
  %s9 = sld [smem:[#allocation0]]
  $region50: #{mhba_token_mixer.1} parent=0
    _
  %s11 = ssub.s32 1, %s9
  %s12 = scalar_select 0, %s11, %s9
  $region1: #{mhba_token_mixer.1} parent=0
    #allocation2 [shape = 'u8[32768]{0}', space=vmem, size = 0x8000, scoped, tag = 'input window, operand 6, single buffered']
    #allocation3 [shape = 's32[1]{0}', space=sflag, size = 0x4, scoped, tag = 'scoped memory for mhba_token_mixer.1']
    #allocation4 [shape = 'u8[512]{0}', space=vmem, size = 0x400, scoped, tag = 'input window, operand 7, single buffered']
    #allocation5 [shape = 's32[1]{0}', space=sflag, size = 0x4, scoped, tag = 'scoped memory for mhba_token_mixer.1']
    %13 = vsyncpa [#allocation3], 0
    %14 = vsyncpa [#allocation5], 0
    // Predicated region
    $region2: #{mhba_token_mixer.1} parent=1 // pred_check
      _
    $region3: #{mhba_token_mixer.1} parent=1 // pred_check_branch
      %16 = sbr.rel (0) target = $region5
    $region4: #{mhba_token_mixer.1} parent=1 // pred_region
      _
    $region5: #{mhba_token_mixer.1} parent=1 // pred_fallthru
      _
    // Predicated region
    $region6: #{mhba_token_mixer.1} parent=1 // pred_check
      _
    $region7: #{mhba_token_mixer.1} parent=1 // pred_check_branch
      %18 = sbr.rel (0) target = $region9
    $region8: #{mhba_token_mixer.1} parent=1 // pred_region
      _
    $region9: #{mhba_token_mixer.1} parent=1 // pred_fallthru
      _
    // Predicated region
    $region10: #{mhba_token_mixer.1} parent=1 // pred_check
      _
    $region11: #{mhba_token_mixer.1} parent=1 // pred_check_branch
      %20 = sbr.rel (0) target = $region13
    $region12: #{mhba_token_mixer.1} parent=1 // pred_region
      _
    $region13: #{mhba_token_mixer.1} parent=1 // pred_fallthru
      _
    // Predicated region
    $region14: #{mhba_token_mixer.1} parent=1 // pred_check
      _
    $region15: #{mhba_token_mixer.1} parent=1 // pred_check_branch
      %22 = sbr.rel (0) target = $region17
    $region16: #{mhba_token_mixer.1} parent=1 // pred_region
      _
    $region17: #{mhba_token_mixer.1} parent=1 // pred_fallthru
      _
    // Predicated region
    $region18: #{mhba_token_mixer.1} parent=1 // pred_check
      _
    $region19: #{mhba_token_mixer.1} parent=1 // pred_check_branch
      %24 = sbr.rel (0) target = $region21
    $region20: #{mhba_token_mixer.1} parent=1 // pred_region
      _
    $region21: #{mhba_token_mixer.1} parent=1 // pred_fallthru
      _
    // Predicated region
    $region22: #{mhba_token_mixer.1} parent=1 // pred_check
      _
    $region23: #{mhba_token_mixer.1} parent=1 // pred_check_branch
      %26 = sbr.rel (0) target = $region25
    $region24: #{mhba_token_mixer.1} parent=1 // pred_region
      _
    $region25: #{mhba_token_mixer.1} parent=1 // pred_fallthru
      _
    // Predicated region
    $region26: #{mhba_token_mixer.1} parent=1 // pred_check
      _
    $region27: #{mhba_token_mixer.1} parent=1 // pred_check_branch
      %28 = sbr.rel (0) target = $region29
    $region28: #{mhba_token_mixer.1} parent=1 // pred_region
      %s30 = ssub.s32 1024, 1024
      %31 = vsyncadd [#allocation3], %s30
      %s32 = sshll.u32 [#allocation2], 4
      %s33 = int_to_ptr.vmem [resolvable:$true] %s32
      %38 = dma.hbm_to_vmem [thread:$0]  %s6, 1024, %s33, [#allocation3], 64, 64, 4
    $region29: #{mhba_token_mixer.1} parent=1 // pred_fallthru
      _
    // Predicated region
    $region30: #{mhba_token_mixer.1} parent=1 // pred_check
      _
    $region31: #{mhba_token_mixer.1} parent=1 // pred_check_branch
      %40 = sbr.rel (0) target = $region33
    $region32: #{mhba_token_mixer.1} parent=1 // pred_region
      %s42 = ssub.s32 16, 16
      %43 = vsyncadd [#allocation5], %s42
      %s45 = sshll.u32 [#allocation4], 4
      %s46 = int_to_ptr.vmem [resolvable:$true] %s45
      %48 = dma.hbm_to_vmem [thread:$0]  %s7, 16, %s46, [#allocation5]
    $region33: #{mhba_token_mixer.1} parent=1 // pred_fallthru
      _
    // Predicated region
    $region34: #{mhba_token_mixer.1} parent=1 // pred_check
      _
    $region35: #{mhba_token_mixer.1} parent=1 // pred_check_branch
      %50 = sbr.rel (0) target = $region37
    $region36: #{mhba_token_mixer.1} parent=1 // pred_region
      %51 = dma.done [#allocation3], 1024
    $region37: #{mhba_token_mixer.1} parent=1 // pred_fallthru
      _
    // Predicated region
    $region38: #{mhba_token_mixer.1} parent=1 // pred_check
      _
    $region39: #{mhba_token_mixer.1} parent=1 // pred_check_branch
      %53 = sbr.rel (0) target = $region41
    $region40: #{mhba_token_mixer.1} parent=1 // pred_region
      %54 = dma.done [#allocation5], 16
    $region41: #{mhba_token_mixer.1} parent=1 // pred_fallthru
      _
    %v56 = vld [vmem:[%s1] sm:$0x1]
    %v57 = vld [vmem:[%s2] sm:$0x1]
    %v58 = vld [vmem:[%s4] sm:$0x1]
    %v59 = vld [vmem:[%s5] sm:$0x1]
    %v60 = vld [vmem:[%s3] sm:$0xf]
    %v61 = vld [vmem:[%s3 + $0x4] sm:$0xf]
    %v62 = vld [vmem:[%s3 + $0x8] sm:$0xf]
    %v63 = vld [vmem:[%s3 + $0xc] sm:$0xf]
    %v64 = vld [vmem:[%s3 + $0x10] sm:$0xf]
    %v65 = vld [vmem:[%s3 + $0x14] sm:$0xf]
    %v66 = vld [vmem:[%s3 + $0x18] sm:$0xf]
    %v67 = vld [vmem:[%s3 + $0x1c] sm:$0xf]
    %v68 = vld [vmem:[%s3 + $0x20] sm:$0xf]
    %v69 = vld [vmem:[%s3 + $0x24] sm:$0xf]
    %v70 = vld [vmem:[%s3 + $0x28] sm:$0xf]
    %v71 = vld [vmem:[%s3 + $0x2c] sm:$0xf]
    %v72 = vld [vmem:[%s3 + $0x30] sm:$0xf]
    %v73 = vld [vmem:[%s3 + $0x34] sm:$0xf]
    %v74 = vld [vmem:[%s3 + $0x38] sm:$0xf]
    %v75 = vld [vmem:[%s3 + $0x3c] sm:$0xf]
    %v76 = vld [vmem:[#allocation2] sm:$0xf]
    %v77 = vld [vmem:[#allocation2 + $0x4] sm:$0xf]
    %v78 = vld [vmem:[#allocation2 + $0x8] sm:$0xf]
    %v79 = vld [vmem:[#allocation2 + $0xc] sm:$0xf]
    %v80 = vld [vmem:[#allocation2 + $0x10] sm:$0xf]
    %v81 = vld [vmem:[#allocation2 + $0x14] sm:$0xf]
    %v82 = vld [vmem:[#allocation2 + $0x18] sm:$0xf]
    %v83 = vld [vmem:[#allocation2 + $0x1c] sm:$0xf]
    %v84 = vld [vmem:[#allocation2 + $0x20] sm:$0xf]
    %v85 = vld [vmem:[#allocation2 + $0x24] sm:$0xf]
    %v86 = vld [vmem:[#allocation2 + $0x28] sm:$0xf]
    %v87 = vld [vmem:[#allocation2 + $0x2c] sm:$0xf]
    %v88 = vld [vmem:[#allocation2 + $0x30] sm:$0xf]
    %v89 = vld [vmem:[#allocation2 + $0x34] sm:$0xf]
    %v90 = vld [vmem:[#allocation2 + $0x38] sm:$0xf]
    %v91 = vld [vmem:[#allocation2 + $0x3c] sm:$0xf]
    %v92 = vld [vmem:[#allocation4] sm:$0x1]
    %v93 = vld [vmem:[%s0] sm:$0xf]
    %v94 = vld [vmem:[%s0 + $0x4] sm:$0xf]
    %v95 = vunpack.c.l.bf16 %v93
    %v96 = vunpack.c.l.bf16 %v94
    %97 = vadd.xlane.f32.xlu0 %v95
    %v98 = vpop.xlane.xlu0 %97
    %99 = vadd.xlane.f32.xlu0 %v96
    %v100 = vpop.xlane.xlu0 %99
    %v101 = vmul.f32 %v95, %v95
    %v102 = vmul.f32 %v96, %v96
    %103 = vadd.xlane.f32.xlu0 %v101
    %v104 = vpop.xlane.xlu0 %103
    %105 = vadd.xlane.f32.xlu0 %v102
    %v106 = vpop.xlane.xlu0 %105
    %v107 = vmul.f32 %v98, 0.03125
    %v108 = vmul.f32 %v100, 0.03125
    %v109 = vmul.f32 %v104, 0.03125
    %v110 = vmul.f32 %v106, 0.03125
    %v111 = vmul.f32 %v107, %v107
    %v112 = vmul.f32 %v108, %v108
    %v113 = vsub.f32 %v109, %v111
    %v114 = vsub.f32 %v110, %v112
    %v115 = vmax.f32 %v113, 0.0
    %v116 = vmax.f32 %v114, 0.0
    %v117 = vsub.f32 %v95, %v107
    %v118 = vsub.f32 %v96, %v108
    %v119 = vadd.f32 %v115, 1e-05
    %v120 = vadd.f32 %v116, 1e-05
    %v121 = vrsqrt.pop %v119
    %v122 = vrsqrt.pop %v120
    %v123 = vmul.f32 %v117, %v121
    %v124 = vmul.f32 %v118, %v122
    %v126 = vlaneseq
    %v127 = vshrl.u32 %v126, 7
    %v128 = vsub.s32 0, %v127
    %v129 = vrot.slane %v56, %v128
    %v131 = vmul.f32 %v123, %v129
    %v132 = vmul.f32 %v124, %v129
    %v134 = vlaneseq
    %v135 = vshrl.u32 %v134, 7
    %v136 = vsub.s32 0, %v135
    %v137 = vrot.slane %v57, %v136
    %v139 = vadd.f32 %v131, %v137
    %v140 = vadd.f32 %v132, %v137
    %v141 = vmul.f32 %v139, 0.5
    %v142 = vmul.f32 %v140, 0.5
    %v143 = vmul.f32 %v139, 0.044715
    %v144 = vmul.f32 %v140, 0.044715
    %v145 = vmul.f32 %v143, %v139
    %v146 = vmul.f32 %v144, %v140
    %v147 = vmul.f32 %v145, %v139
    %v148 = vmul.f32 %v146, %v140
    %v149 = vadd.f32 %v139, %v147
    %v150 = vadd.f32 %v140, %v148
    %v151 = vmul.f32 %v149, 0.7978846
    %v152 = vmul.f32 %v150, 0.7978846
    %v153 = vtanh.pop %v151
    %v154 = vtanh.pop %v152
    %v155 = vadd.f32 %v153, 1.0
    %v156 = vadd.f32 %v154, 1.0
    %v157 = vmul.f32 %v141, %v155
    %v158 = vmul.f32 %v142, %v156
    %v159 = vpack.c.bf16 %v158, %v157
    %v176 = vunpack.c.l.b16 %v60
    %v177 = vunpack.c.l.b16 %v61
    %v178 = vunpack.c.l.b16 %v62
    %v179 = vunpack.c.l.b16 %v63
    %v180 = vunpack.c.l.b16 %v64
    %v181 = vunpack.c.l.b16 %v65
    %v182 = vunpack.c.l.b16 %v66
    %v183 = vunpack.c.l.b16 %v67
    %v184 = vunpack.c.l.b16 %v68
    %v185 = vunpack.c.l.b16 %v69
    %v186 = vunpack.c.l.b16 %v70
    %v187 = vunpack.c.l.b16 %v71
    %v188 = vunpack.c.l.b16 %v72
    %v189 = vunpack.c.l.b16 %v73
    %v190 = vunpack.c.l.b16 %v74
    %v191 = vunpack.c.l.b16 %v75
    %v192 = vpack.c.b16 %v177, %v176
    %v193 = vpack.c.b16 %v179, %v178
    %v194 = vpack.c.b16 %v181, %v180
    %v195 = vpack.c.b16 %v183, %v182
    %v196 = vpack.c.b16 %v185, %v184
    %v197 = vpack.c.b16 %v187, %v186
    %v198 = vpack.c.b16 %v189, %v188
    %v199 = vpack.c.b16 %v191, %v190
    %208 = vmatprep.subr.bf16.mxu0 0
    %209 = vmatpush1.bf16.msra.mxu0 %v192
    %210 = vmatprep.subr.bf16.mxu0 0
    %211 = vmatpush1.bf16.msra.mxu0 %v193
    %212 = vmatprep.subr.bf16.mxu0 0
    %213 = vmatpush1.bf16.msra.mxu0 %v194
    %214 = vmatprep.subr.bf16.mxu0 0
    %215 = vmatpush1.bf16.msra.mxu0 %v195
    %216 = vmatprep.subr.bf16.mxu0 0
    %217 = vmatpush1.bf16.msra.mxu0 %v196
    %218 = vmatprep.subr.bf16.mxu0 0
    %219 = vmatpush1.bf16.msra.mxu0 %v197
    %220 = vmatprep.subr.bf16.mxu0 0
    %221 = vmatpush1.bf16.msra.mxu0 %v198
    %222 = vmatprep.subr.bf16.mxu0 0
    %223 = vmatpush1.bf16.msra.mxu0 %v199
    %224 = vmatprep.subr.bf16.mxu0 0
    %225 = vmatpush1.bf16.msra.mxu0 0
    %226 = vmatprep.subr.bf16.mxu0 0
    %227 = vmatpush1.bf16.msra.mxu0 0
    %228 = vmatprep.subr.bf16.mxu0 0
    %229 = vmatpush1.bf16.msra.mxu0 0
    %230 = vmatprep.subr.bf16.mxu0 0
    %231 = vmatpush1.bf16.msra.mxu0 0
    %232 = vmatprep.subr.bf16.mxu0 0
    %233 = vmatpush1.bf16.msra.mxu0 0
    %234 = vmatprep.subr.bf16.mxu0 0
    %235 = vmatpush1.bf16.msra.mxu0 0
    %236 = vmatprep.subr.bf16.mxu0 0
    %237 = vmatpush1.bf16.msra.mxu0 0
    %238 = vmatprep.subr.bf16.mxu0 0
    %239 = vmatpush1.bf16.msra.mxu0 0
    %240 = vmatprep.mubr.bf16.mxu0 0
    %241 = vmatmul.mubr.bf16.gmra.mrb[0].mxu0 %v159
    %v242 = vpop.f32.mrb[0].mxu0
    %v243 = vadd.f32 0.0, %v242
    %v244 = vpop.f32.mrb[0].mxu0
    %v245 = vpop.f32.mrb[0].mxu0
    %v246 = vadd.f32 0.0, %v245
    %v247 = vpop.f32.mrb[0].mxu0
    %248 = vdwg.mxu0
    %249 = vadd.xlane.f32.xlu0 %v243
    %v250 = vpop.xlane.xlu0 %249
    %251 = vadd.xlane.f32.xlu0 %v246
    %v252 = vpop.xlane.xlu0 %251
    %v253 = vmul.f32 %v243, %v243
    %v254 = vmul.f32 %v246, %v246
    %255 = vadd.xlane.f32.xlu0 %v253
    %v256 = vpop.xlane.xlu0 %255
    %257 = vadd.xlane.f32.xlu0 %v254
    %v258 = vpop.xlane.xlu0 %257
    %v259 = vmul.f32 %v250, 0.015625
    %v260 = vmul.f32 %v252, 0.015625
    %v261 = vmul.f32 %v256, 0.015625
    %v262 = vmul.f32 %v258, 0.015625
    %v263 = vmul.f32 %v259, %v259
    %v264 = vmul.f32 %v260, %v260
    %v265 = vsub.f32 %v261, %v263
    %v266 = vsub.f32 %v262, %v264
    %v267 = vmax.f32 %v265, 0.0
    %v268 = vmax.f32 %v266, 0.0
    %v269 = vsub.f32 %v243, %v259
    %v270 = vsub.f32 %v246, %v260
    %v271 = vadd.f32 %v267, 1e-05
    %v272 = vadd.f32 %v268, 1e-05
    %v273 = vrsqrt.pop %v271
    %v274 = vrsqrt.pop %v272
    %v275 = vmul.f32 %v269, %v273
    %v276 = vmul.f32 %v270, %v274
    %v278 = vlaneseq
    %v279 = vshrl.u32 %v278, 7
    %v280 = vsub.s32 0, %v279
    %v281 = vrot.slane %v58, %v280
    %v283 = vmul.f32 %v275, %v281
    %v284 = vmul.f32 %v276, %v281
    %v286 = vlaneseq
    %v287 = vshrl.u32 %v286, 7
    %v288 = vsub.s32 0, %v287
    %v289 = vrot.slane %v59, %v288
    %v291 = vadd.f32 %v283, %v289
    %v292 = vadd.f32 %v284, %v289
    %v293 = vmul.f32 %v291, 0.5
    %v294 = vmul.f32 %v292, 0.5
    %v295 = vmul.f32 %v291, 0.044715
    %v296 = vmul.f32 %v292, 0.044715
    %v297 = vmul.f32 %v295, %v291
    %v298 = vmul.f32 %v296, %v292
    %v299 = vmul.f32 %v297, %v291
    %v300 = vmul.f32 %v298, %v292
    %v301 = vadd.f32 %v291, %v299
    %v302 = vadd.f32 %v292, %v300
    %v303 = vmul.f32 %v301, 0.7978846
    %v304 = vmul.f32 %v302, 0.7978846
    %v305 = vtanh.pop %v303
    %v306 = vtanh.pop %v304
    %v307 = vadd.f32 %v305, 1.0
    %v308 = vadd.f32 %v306, 1.0
    %v309 = vmul.f32 %v293, %v307
    %v310 = vmul.f32 %v294, %v308
    %v311 = vpack.c.bf16 %v310, %v309
    %v313 = vlaneseq
    %v314 = vshrl.u32 %v313, 7
    %v315 = vsub.s32 0, %v314
    %v316 = vrot.slane %v92, %v315
    %v334 = vunpack.c.l.b16 %v76
    %v335 = vunpack.c.l.b16 %v77
    %v336 = vunpack.c.l.b16 %v78
    %v337 = vunpack.c.l.b16 %v79
    %v338 = vunpack.c.l.b16 %v80
    %v339 = vunpack.c.l.b16 %v81
    %v340 = vunpack.c.l.b16 %v82
    %v341 = vunpack.c.l.b16 %v83
    %v342 = vunpack.c.l.b16 %v84
    %v343 = vunpack.c.l.b16 %v85
    %v344 = vunpack.c.l.b16 %v86
    %v345 = vunpack.c.l.b16 %v87
    %v346 = vunpack.c.l.b16 %v88
    %v347 = vunpack.c.l.b16 %v89
    %v348 = vunpack.c.l.b16 %v90
    %v349 = vunpack.c.l.b16 %v91
    %v350 = vpack.c.b16 %v335, %v334
    %v351 = vpack.c.b16 %v337, %v336
    %v352 = vpack.c.b16 %v339, %v338
    %v353 = vpack.c.b16 %v341, %v340
    %v354 = vpack.c.b16 %v343, %v342
    %v355 = vpack.c.b16 %v345, %v344
    %v356 = vpack.c.b16 %v347, %v346
    %v357 = vpack.c.b16 %v349, %v348
    %366 = vmatprep.subr.bf16.mxu0 0
    %367 = vmatpush1.bf16.msra.mxu0 %v350
    %368 = vmatprep.subr.bf16.mxu0 0
    %369 = vmatpush1.bf16.msra.mxu0 %v351
    %370 = vmatprep.subr.bf16.mxu0 0
    %371 = vmatpush1.bf16.msra.mxu0 %v352
    %372 = vmatprep.subr.bf16.mxu0 0
    %373 = vmatpush1.bf16.msra.mxu0 %v353
    %374 = vmatprep.subr.bf16.mxu0 0
    %375 = vmatpush1.bf16.msra.mxu0 %v354
    %376 = vmatprep.subr.bf16.mxu0 0
    %377 = vmatpush1.bf16.msra.mxu0 %v355
    %378 = vmatprep.subr.bf16.mxu0 0
    %379 = vmatpush1.bf16.msra.mxu0 %v356
    %380 = vmatprep.subr.bf16.mxu0 0
    %381 = vmatpush1.bf16.msra.mxu0 %v357
    %382 = vmatprep.subr.bf16.mxu0 0
    %383 = vmatpush1.bf16.msra.mxu0 0
    %384 = vmatprep.subr.bf16.mxu0 0
    %385 = vmatpush1.bf16.msra.mxu0 0
    %386 = vmatprep.subr.bf16.mxu0 0
    %387 = vmatpush1.bf16.msra.mxu0 0
    %388 = vmatprep.subr.bf16.mxu0 0
    %389 = vmatpush1.bf16.msra.mxu0 0
    %390 = vmatprep.subr.bf16.mxu0 0
    %391 = vmatpush1.bf16.msra.mxu0 0
    %392 = vmatprep.subr.bf16.mxu0 0
    %393 = vmatpush1.bf16.msra.mxu0 0
    %394 = vmatprep.subr.bf16.mxu0 0
    %395 = vmatpush1.bf16.msra.mxu0 0
    %396 = vmatprep.subr.bf16.mxu0 0
    %397 = vmatpush1.bf16.msra.mxu0 0
    %398 = vmatprep.mubr.bf16.mxu0 0
    %399 = vmatmul.mubr.bf16.gmra.mrb[0].mxu0 %v311
    %v400 = vpop.f32.mrb[0].mxu0
    %v401 = vadd.f32 %v316, %v400
    %v402 = vpop.f32.mrb[0].mxu0
    %v403 = vpop.f32.mrb[0].mxu0
    %v404 = vadd.f32 %v316, %v403
    %v405 = vpop.f32.mrb[0].mxu0
    %406 = vdwg.mxu0
    %v407 = vpack.c.bf16 %v404, %v401
    %v409 = vunpack.c.l.b16 %v407
    %v410 = vunpack.c.h.b16 %v407
    %v411 = vpack.c.b16 %v409, %v409
    %v412 = vpack.c.b16 %v410, %v410
    %415 = vst [vmem:[%s8] sm:$0xf] %v411
    %416 = vst [vmem:[%s8 + $0x4] sm:$0xf] %v412
    // Predicated region
    $region42: #{mhba_token_mixer.1} parent=1 // pred_check
      _
    $region43: #{mhba_token_mixer.1} parent=1 // pred_check_branch
      %418 = sbr.rel (0) target = $region45
    $region44: #{mhba_token_mixer.1} parent=1 // pred_region
      _
    $region45: #{mhba_token_mixer.1} parent=1 // pred_fallthru
      _
    // Predicated region
    $region46: #{mhba_token_mixer.1} parent=1 // pred_check
      _
    $region47: #{mhba_token_mixer.1} parent=1 // pred_check_branch
      %420 = sbr.rel (0) target = $region49
    $region48: #{mhba_token_mixer.1} parent=1 // pred_region
      _
    $region49: #{mhba_token_mixer.1} parent=1 // pred_fallthru
      _
    %421 = vsyncpa [#allocation3], 1
    %422 = vsyncpa [#allocation5], 1

</llo_original>
